<compile_context>
chip_gen: v6e
topology: v6e:2x2x1
jax: 0.10.0
libtpu: 0.0.40
codegen_flags: <defaults>
</compile_context>

<pallas_src>
import functools

import jax
import jax.numpy as jnp
from jax.experimental import pallas as pl
from jax.experimental.pallas import tpu as pltpu


def _round_up(x, m):
    return pl.cdiv(x, m) * m


_VMEM_BUDGET = 22 << 20        # per-grid-step working-set target (fits v5e..v7x)
_FUSE_K_LIMIT = 512            # stack the 4 taps into one MXU dot when 4*C4p <= this


# ----------------------------- Pallas kernel --------------------------------
def _downsample_kernel(x_ref, w_ref, o_ref, *scratch, shifts, c4p,
                       negative_slope, fuse_taps):
    """Fused s2d-conv (2x2, stride 1) + LeakyReLU for one (sample, spatial tile).

    x_ref : (C4p, TLin)      s2d input slab incl. (Wl+1)-lane halo, bf16
    w_ref : (Cout_p, 4*C4p)  stacked-tap weight   [fuse_taps=True]
            (4, Cout_p, C4p) per-tap weight       [fuse_taps=False]
    o_ref : (Cout_p, TL)     lane-dense output tile
    scratch[0] : (4*C4p, TL) stacked-tap staging buffer [fuse_taps=True only]
    """
    tl = o_ref.shape[-1]
    if fuse_taps:
        # One MXU contraction with K = 4*C4p: no separate per-tap results, no
        # full-tile f32 VPU adds.
        xstk = scratch[0]
        for t, s in enumerate(shifts):                       # static unroll, 4 taps
            xstk[t * c4p:(t + 1) * c4p, :] = x_ref[:, s:s + tl]
        acc = jnp.dot(w_ref[...], xstk[...], preferred_element_type=jnp.float32)
    else:
        # Large-K path: K = C4p already keeps the MXU busy; accumulate the 4 taps.
        acc = None
        for t, s in enumerate(shifts):
            p = jnp.dot(w_ref[t], x_ref[:, s:s + tl],
                        preferred_element_type=jnp.float32)
            acc = p if acc is None else acc + p
    # LeakyReLU(0.2) == max(x, 0.2*x) for slope < 1 (mul+max, no compare+select).
    o_ref[...] = jnp.maximum(acc, negative_slope * acc).astype(o_ref.dtype)


# ------------------------------ forward --------------------------------------
def downsample_forward(x_nchw, weight, *, negative_slope=0.2,
                       compute_dtype=jnp.bfloat16, out_dtype=jnp.float32,
                       tile_lanes=2048, crop=True):
    """Equivalent of DownSample.forward.

    x_nchw : (N, Cin, H, W) float32, H and W even
    weight : (Cout, Cin, 4, 4) float32 (PyTorch Conv2d OIHW layout, bias=False)
    returns: (N, Cout, H//2, W//2) in out_dtype (crop=True), or the raw padded
             (N, Cout_p, nT*TL) lane-dense slab (crop=False) for a fused consumer.
    """
    N, Cin, H, W = x_nchw.shape
    Cout, Cin_w, KH, KW = weight.shape
    assert (KH, KW) == (4, 4) and Cin_w == Cin
    assert H % 2 == 0 and W % 2 == 0, "DownSample expects even spatial dims"

    Ho, Wo = H // 2, W // 2
    Wl = Wo + 1                          # s2d width of the padded image ((W+2)/2)
    L_in = (Ho + 1) * Wl                 # full flattened s2d input extent
    L_out = Ho * Wl                      # flattened output extent (row stride Wl)
    C4 = Cin * 4
    C4p = _round_up(C4, 16)              # bf16 packs 16 rows per vreg
    Cout_p = _round_up(Cout, 16)
    fuse_taps = (4 * C4p) <= _FUSE_K_LIMIT
    shifts = (0, 1, Wl, Wl + 1)          # tap order (bh, bw) = 00, 01, 10, 11

    isz = jnp.dtype(compute_dtype).itemsize
    osz = jnp.dtype(out_dtype).itemsize
    halo = _round_up(Wl + 1, 128)        # lane halo, rounded so TLin is 128-aligned

    # --- real per-grid-step VMEM need (incl. f32 matmul intermediates) ---------
    def vmem_bytes(tl):
        b = 2 * C4p * (tl + halo) * isz          # input slab, double-buffered
        b += 2 * Cout_p * tl * osz               # output tile, double-buffered
        b += 4 * Cout_p * C4p * isz              # weight (single buffer)
        if fuse_taps:
            b += 4 * C4p * tl * isz              # stacked-tap scratch
        b += 2 * Cout_p * tl * 4                 # f32 MXU result + activation temp
        return b + (1 << 20)                     # slack

    # --- spatial tile width: as large as the budget allows, multiple of 128 ----
    TL = min(_round_up(L_out, 128), max(128, _round_up(tile_lanes, 128)))
    while TL > 128 and vmem_bytes(TL) > _VMEM_BUDGET:
        TL = _round_up(TL // 2, 128)
    TLin = TL + halo
    nT = pl.cdiv(L_out, TL)
    Lflat = (nT - 1) * TL + TLin
    need = vmem_bytes(TL)
    # Always set the scoped limit: >= need+25% for every reachable TL, >= v5e's 16 MiB
    # default, and <= half of v7x's 64 MiB per-TC VMEM for normal channel counts.
    vmem_limit = int(min(max(32 << 20, need + need // 4), 64 << 20))

    # --- glue: early bf16 cast, pad + space-to-depth(2) + flatten, tile w/ halo --
    xb = x_nchw.astype(compute_dtype)                               # cast FIRST
    xp = jnp.pad(xb, ((0, 0), (0, 0), (1, 1), (1, 1)))              # (N,Cin,2(Ho+1),2Wl)
    xs = xp.reshape(N, Cin, Ho + 1, 2, Wl, 2)                       # (n,c,I,dh,J,dw)
    xs = xs.transpose(0, 1, 3, 5, 2, 4).reshape(N, C4, L_in)        # c4 = c*4+dh*2+dw
    xs = jnp.pad(xs, ((0, 0), (0, C4p - C4), (0, Lflat - L_in)))
    # Per-tile slabs with replicated halo (contiguous copies; tiny duplication).
    xs_tiled = jnp.stack([xs[:, :, t * TL:t * TL + TLin] for t in range(nT)],
                         axis=1)                                    # (N,nT,C4p,TLin)

    # --- glue: weight -> per-tap (4, Cout_p, C4p), optionally stacked on K ------
    w6 = weight.astype(compute_dtype).reshape(Cout, Cin, 2, 2, 2, 2)  # (co,c,bh,dh,bw,dw)
    ws = w6.transpose(2, 4, 0, 1, 3, 5).reshape(4, Cout, C4)          # (bh*2+bw, co, c4)
    ws = jnp.pad(ws, ((0, 0), (0, Cout_p - Cout), (0, C4p - C4)))
    if fuse_taps:
        w_arg = ws.transpose(1, 0, 2).reshape(Cout_p, 4 * C4p)        # k = tap*C4p + c4
        w_block, w_imap = (Cout_p, 4 * C4p), (lambda n, t: (0, 0))
        scratch = [pltpu.VMEM((4 * C4p, TL), compute_dtype)]
    else:
        w_arg = ws
        w_block, w_imap = (4, Cout_p, C4p), (lambda n, t: (0, 0, 0))
        scratch = []

    # Constant index_map -> the weight never changes; a single buffer is enough.
    try:
        w_spec = pl.BlockSpec(w_block, w_imap, pipeline_mode=pl.Buffered(1))
    except Exception:  # older/newer API without pipeline_mode: default buffering
        w_spec = pl.BlockSpec(w_block, w_imap)

    kernel = functools.partial(_downsample_kernel, shifts=shifts, c4p=C4p,
                               negative_slope=negative_slope, fuse_taps=fuse_taps)

    out = pl.pallas_call(
        kernel,
        out_shape=jax.ShapeDtypeStruct((N, Cout_p, nT * TL), out_dtype),
        grid_spec=pltpu.PrefetchScalarGridSpec(
            num_scalar_prefetch=0,
            grid=(N, nT),
            in_specs=[
                pl.BlockSpec((None, None, C4p, TLin), lambda n, t: (n, t, 0, 0)),
                w_spec,
            ],
            out_specs=pl.BlockSpec((None, Cout_p, TL), lambda n, t: (n, 0, t)),
            scratch_shapes=scratch,
        ),
        compiler_params=pltpu.CompilerParams(
            dimension_semantics=("parallel", "parallel"),  # batch x tiles -> v7x megacore
            vmem_limit_bytes=vmem_limit,
        ),
    )(xs_tiled, w_arg)

    if not crop:
        # Padded lane-dense slab: channels [0:Cout] valid, spatial l = i*Wl + j
        # (j < Wo valid).  Hand this to a fused consumer to skip the crop copy.
        return out

    out = out[:, :Cout, :L_out].reshape(N, Cout, Ho, Wl)
    return out[:, :, :, :Wo]


# ------------------------------- main ----------------------------------------
if __name__ == "__main__":
    def ref_downsample(x, w, negative_slope=0.2):
        # Same conv semantics as nn.Conv2d(4,2,1,bias=False) + LeakyReLU(0.2),
        # evaluated on the same bf16-rounded operands the kernel streams.
        rx = x.astype(jnp.bfloat16).astype(jnp.float32)
        rw = w.astype(jnp.bfloat16).astype(jnp.float32)
        y = jax.lax.conv_general_dilated(
            rx, rw, window_strides=(2, 2), padding=((1, 1), (1, 1)),
            dimension_numbers=("NCHW", "OIHW", "NCHW"),
            preferred_element_type=jnp.float32,
            precision=jax.lax.Precision.HIGHEST)
        return jnp.maximum(y, negative_slope * y)

    fwd = jax.jit(downsample_forward,
                  static_argnames=("negative_slope", "compute_dtype", "out_dtype",
                                   "tile_lanes", "crop"))

    key = jax.random.PRNGKey(0)
    # (N, Cin, Cout, H, W): fused-tap single-tile / fused-tap multi-tile / loop path.
    cases = [
        (2, 4, 8, 16, 16),
        (1, 3, 16, 128, 128),
        (2, 40, 16, 16, 16),
    ]
    last = None
    for (N, Cin, Cout, H, W) in cases:
        key, kx, kw = jax.random.split(key, 3)
        x = jax.random.normal(kx, (N, Cin, H, W), dtype=jnp.float32)
        w = 0.05 * jax.random.normal(kw, (Cout, Cin, 4, 4), dtype=jnp.float32)
        out = jax.block_until_ready(fwd(x, w))
        ref = ref_downsample(x, w)
        assert out.shape == (N, Cout, H // 2, W // 2), out.shape
        assert jnp.allclose(out, ref, atol=1e-3, rtol=1e-3)
        last = (x, w, ref)

    # bf16-output fast path (halved output HBM traffic); looser tolerance for bf16 store.
    x, w, ref = last
    out_bf16 = jax.block_until_ready(fwd(x, w, out_dtype=jnp.bfloat16))
    assert jnp.allclose(out_bf16.astype(jnp.float32), ref, atol=2e-2, rtol=2e-2)

    print("KERNEL_OK")
</pallas_src>

<mosaic_0001>
module attributes {stable_mosaic.version = 11 : i64} {
  func.func @_downsample_kernel(%arg0: i32, %arg1: i32, %arg2: memref<1x1x16x256xbf16, #tpu.memory_space<vmem>>, %arg3: memref<16x64xbf16, #tpu.memory_space<vmem>>, %arg4: memref<1x16x128xf32, #tpu.memory_space<vmem>>, %arg5: memref<64x128xbf16, #tpu.memory_space<vmem>>) attributes {dimension_semantics = [#tpu.dimension_semantics<parallel>, #tpu.dimension_semantics<parallel>], iteration_bounds = array<i64: 2, 1>, scalar_prefetch = 0 : i64, scratch_operands = 1 : i64, tpu.core_type = #tpu.core_type<tc>, window_params = [{transform_indices = @transform_0, window_bounds = array<i64: 1, 1, 16, 256>}, {pipeline_mode = #tpu.pipeline_mode<synchronous>, transform_indices = @transform_1, window_bounds = array<i64: 16, 64>}, {transform_indices = @transform_2, window_bounds = array<i64: 1, 16, 128>}]} {
    %c0 = arith.constant 0 : index
    %c0_0 = arith.constant 0 : index
    %c0_1 = arith.constant 0 : index
    %c0_2 = arith.constant 0 : index
    %0 = vector.load %arg2[%c0, %c0_0, %c0_1, %c0_2] : memref<1x1x16x256xbf16, #tpu.memory_space<vmem>>, vector<1x1x16x128xbf16>
    %1 = vector.shape_cast %0 : vector<1x1x16x128xbf16> to vector<16x128xbf16>
    %c0_3 = arith.constant 0 : index
    %c0_4 = arith.constant 0 : index
    %2 = vector.load %arg5[%c0_3, %c0_4] : memref<64x128xbf16, #tpu.memory_space<vmem>>, vector<16x128xbf16>
    tpu.vector_store %arg5[%c0_3, %c0_4], %1 {strides = array<i32>} : memref<64x128xbf16, #tpu.memory_space<vmem>>, vector<16x128xbf16>,
    %c0_5 = arith.constant 0 : index
    %c0_6 = arith.constant 0 : index
    %c0_7 = arith.constant 0 : index
    %c1 = arith.constant 1 : index
    %3 = vector.load %arg2[%c0_5, %c0_6, %c0_7, %c1] : memref<1x1x16x256xbf16, #tpu.memory_space<vmem>>, vector<1x1x16x128xbf16>
    %4 = vector.shape_cast %3 : vector<1x1x16x128xbf16> to vector<16x128xbf16>
    %c16 = arith.constant 16 : index
    %c0_8 = arith.constant 0 : index
    %5 = vector.load %arg5[%c16, %c0_8] : memref<64x128xbf16, #tpu.memory_space<vmem>>, vector<16x128xbf16>
    tpu.vector_store %arg5[%c16, %c0_8], %4 {strides = array<i32>} : memref<64x128xbf16, #tpu.memory_space<vmem>>, vector<16x128xbf16>,
    %c0_9 = arith.constant 0 : index
    %c0_10 = arith.constant 0 : index
    %c0_11 = arith.constant 0 : index
    %c9 = arith.constant 9 : index
    %6 = vector.load %arg2[%c0_9, %c0_10, %c0_11, %c9] : memref<1x1x16x256xbf16, #tpu.memory_space<vmem>>, vector<1x1x16x128xbf16>
    %7 = vector.shape_cast %6 : vector<1x1x16x128xbf16> to vector<16x128xbf16>
    %c32 = arith.constant 32 : index
    %c0_12 = arith.constant 0 : index
    %8 = vector.load %arg5[%c32, %c0_12] : memref<64x128xbf16, #tpu.memory_space<vmem>>, vector<16x128xbf16>
    tpu.vector_store %arg5[%c32, %c0_12], %7 {strides = array<i32>} : memref<64x128xbf16, #tpu.memory_space<vmem>>, vector<16x128xbf16>,
    %c0_13 = arith.constant 0 : index
    %c0_14 = arith.constant 0 : index
    %c0_15 = arith.constant 0 : index
    %c10 = arith.constant 10 : index
    %9 = vector.load %arg2[%c0_13, %c0_14, %c0_15, %c10] : memref<1x1x16x256xbf16, #tpu.memory_space<vmem>>, vector<1x1x16x128xbf16>
    %10 = vector.shape_cast %9 : vector<1x1x16x128xbf16> to vector<16x128xbf16>
    %c48 = arith.constant 48 : index
    %c0_16 = arith.constant 0 : index
    %11 = vector.load %arg5[%c48, %c0_16] : memref<64x128xbf16, #tpu.memory_space<vmem>>, vector<16x128xbf16>
    tpu.vector_store %arg5[%c48, %c0_16], %10 {strides = array<i32>} : memref<64x128xbf16, #tpu.memory_space<vmem>>, vector<16x128xbf16>,
    %c0_17 = arith.constant 0 : index
    %c0_18 = arith.constant 0 : index
    %12 = vector.load %arg3[%c0_17, %c0_18] : memref<16x64xbf16, #tpu.memory_space<vmem>>, vector<16x64xbf16>
    %c0_19 = arith.constant 0 : index
    %c0_20 = arith.constant 0 : index
    %13 = vector.load %arg5[%c0_19, %c0_20] : memref<64x128xbf16, #tpu.memory_space<vmem>>, vector<64x128xbf16>
    %cst = arith.constant dense<0.000000e+00> : vector<16x128xf32>
    %14 = tpu.matmul %12, %13, %cst {dimension_numbers = #tpu.dot_dimension_numbers<[1], [0], [0], [1], [0, 0, 1, 1], [], []>} : vector<16x64xbf16>, vector<64x128xbf16>, vector<16x128xf32> -> vector<16x128xf32>
    %cst_21 = arith.constant 2.000000e-01 : f32
    %15 = vector.broadcast %cst_21 : f32 to vector<16x128xf32>
    %16 = arith.mulf %15, %14 : vector<16x128xf32>
    %17 = arith.maximumf %14, %16 : vector<16x128xf32>
    %c0_22 = arith.constant 0 : index
    %c0_23 = arith.constant 0 : index
    %c0_24 = arith.constant 0 : index
    %18 = vector.load %arg4[%c0_22, %c0_23, %c0_24] : memref<1x16x128xf32, #tpu.memory_space<vmem>>, vector<1x16x128xf32>
    %19 = vector.shape_cast %18 : vector<1x16x128xf32> to vector<16x128xf32>
    %20 = vector.shape_cast %17 : vector<16x128xf32> to vector<1x16x128xf32>
    tpu.vector_store %arg4[%c0_22, %c0_23, %c0_24], %20 {strides = array<i32>} : memref<1x16x128xf32, #tpu.memory_space<vmem>>, vector<1x16x128xf32>,
    return
  }
  func.func @transform_0(%arg0: i32, %arg1: i32) -> (i32, i32, i32, i32) {
    %c0_i32 = arith.constant 0 : i32
    %c0_i32_0 = arith.constant 0 : i32
    %c0_i32_1 = arith.constant 0 : i32
    return %arg0, %arg1, %c0_i32, %c0_i32_0 : i32, i32, i32, i32
  }
  func.func @transform_1(%arg0: i32, %arg1: i32) -> (i32, i32) {
    %c0_i32 = arith.constant 0 : i32
    %c0_i32_0 = arith.constant 0 : i32
    %c0_i32_1 = arith.constant 0 : i32
    return %c0_i32, %c0_i32_0 : i32, i32
  }
  func.func @transform_2(%arg0: i32, %arg1: i32) -> (i32, i32, i32) {
    %c0_i32 = arith.constant 0 : i32
    %c0_i32_0 = arith.constant 0 : i32
    return %arg0, %c0_i32, %arg1 : i32, i32, i32
  }
}

</mosaic_0001>

<llo_original>
// kernel: downsample_forward.1
$region0: #{downsample_forward.1}
  #allocation0 [shape = 'u32[]', space=smem, size = 0x4, offset = 0x4, fixed_abs, tag = 'smem constant byte address 0x4 - core index']
  #allocation1 [shape = 'u32[144,128]{1,0:T(1,128)}', space=vmem, size = 0x12000, scoped, tag = 'internal scratch']
  #allocation2 [shape = 'bf16[64,128]{1,0:T(8,128)(2,1)}', space=vmem, size = 0x4000, scoped, tag = 'scratch operand']
  %s0 = inlined_call_operand.vmem [shape: bf16[2,1,16,256], index: 0, kind: input, shape index: {}]
  %s1 = inlined_call_operand.vmem [shape: bf16[16,64], index: 1, kind: input, shape index: {}]
  %s2 = inlined_call_operand.vmem [shape: f32[2,16,128], index: 2, kind: output, shape index: {}]
  %s3 = sld [smem:[#allocation0]]
  $region41: #{downsample_forward.1} parent=0
    _
  %s5 = ssub.s32 1, %s3
  %s6 = scalar_select 0, %s5, %s3
  loop: start=0, step=1, limit=4
  $region2: #{downsample_forward.1} parent=0 // loop_pre_header
    _
  $region3: #{downsample_forward.1} parent=0 // loop_header
    %s8 = sphi 0, %s12
    %p9 = scmp.ge.s32.totalorder %s8, 4
    %s15 = sphi 0, %s27
    %s16 = sphi 0, %s23
    %s17 = sphi 0, %s15
    %s18 = sphi 0, %s16
    %s19 = sphi 0, %s17
    %s20 = sphi 0, %s18
    %s32 = sphi 0, %s34
    %s35 = sphi 0, %s32
    %s36 = sphi 0, %s35
    %s52 = sphi 0, %s36
    %s56 = sphi 0, %s56
    %s58 = sphi 0, %s56
    %s59 = sphi 0, %s58
    %s73 = sphi 0, %s59
    %s81 = sphi 0, %s83
    %s84 = sphi 0, %s81
    %s85 = sphi 0, %s84
    %s101 = sphi 0, %s85
  $region4: #{downsample_forward.1} parent=0 // loop_header_branch
    %11 = sbr.rel (%p9) target = $region8
  $region5: #{downsample_forward.1} parent=0 // loop_body
    %s13 = ssub.s32 %s8, 1
    %s14 = ssub.s32 %s8, 2
    %s21 = sadd.s32 1, %s16
    %p22 = scmp.ge.s32.totalorder %s21, 1
    %s23 = scalar_select %p22, 0, %s21
    %s24 = sadd.s32 1, %s15
    %s25 = scalar_select %p22, %s24, %s15
    %p26 = scmp.ge.s32.totalorder %s25, 2
    %s27 = scalar_select %p26, 0, %s25
    %s28 = ssub.s32 %s15, %s27
    %s29 = ssub.s32 %s16, %s23
    %s30 = sor.u32 %s28, %s29
    %p31 = scmp.eq.s32.totalorder %s30, 0
    %s33 = sadd.s32 %s32, 1
    %s34 = scalar_select %p31, %s32, %s33
    %p37 = pneg %p31
    %p38 = scmp.eq.s32.totalorder %s8, 1
    %p39 = por %p37, %p38
    %p40 = scmp.ne.s32.totalorder %s32, %s35
    %p41 = scmp.eq.s32.totalorder %s8, 0
    %p42 = por %p40, %p41
    %p43 = scmp.ne.s32.totalorder %s32, %s35
    %p44 = scmp.eq.s32.totalorder %s13, 1
    %p45 = por %p43, %p44
    %p46 = scmp.ne.s32.totalorder %s35, %s36
    %p47 = scmp.eq.s32.totalorder %s13, 0
    %p48 = por %p46, %p47
    %p49 = scmp.ne.s32.totalorder %s35, %s36
    %p50 = scmp.eq.s32.totalorder %s14, 1
    %p51 = por %p49, %p50
    %p53 = scmp.ne.s32.totalorder %s36, %s52
    %p54 = scmp.eq.s32.totalorder %s14, 0
    %p55 = por %p53, %p54
    %s57 = sadd.s32 %s56, 1
    %p60 = scmp.eq.s32.totalorder %s8, 1
    %p61 = scmp.ne.s32.totalorder %s56, %s58
    %p62 = scmp.eq.s32.totalorder %s8, 0
    %p63 = por %p61, %p62
    %p64 = scmp.ne.s32.totalorder %s56, %s58
    %p65 = scmp.eq.s32.totalorder %s13, 1
    %p66 = por %p64, %p65
    %p67 = scmp.ne.s32.totalorder %s58, %s59
    %p68 = scmp.eq.s32.totalorder %s13, 0
    %p69 = por %p67, %p68
    %p70 = scmp.ne.s32.totalorder %s58, %s59
    %p71 = scmp.eq.s32.totalorder %s14, 1
    %p72 = por %p70, %p71
    %p74 = scmp.ne.s32.totalorder %s59, %s73
    %p75 = scmp.eq.s32.totalorder %s14, 0
    %p76 = por %p74, %p75
    %s77 = ssub.s32 %s15, %s27
    %s78 = ssub.s32 %s16, %s23
    %s79 = sor.u32 %s77, %s78
    %p80 = scmp.eq.s32.totalorder %s79, 0
    %s82 = sadd.s32 %s81, 1
    %s83 = scalar_select %p80, %s81, %s82
    %p86 = pneg %p80
    %p87 = scmp.eq.s32.totalorder %s8, 1
    %p88 = por %p86, %p87
    %p89 = scmp.ne.s32.totalorder %s81, %s84
    %p90 = scmp.eq.s32.totalorder %s8, 0
    %p91 = por %p89, %p90
    %p92 = scmp.ne.s32.totalorder %s81, %s84
    %p93 = scmp.eq.s32.totalorder %s13, 1
    %p94 = por %p92, %p93
    %p95 = scmp.ne.s32.totalorder %s84, %s85
    %p96 = scmp.eq.s32.totalorder %s13, 0
    %p97 = por %p95, %p96
    %p98 = scmp.ne.s32.totalorder %s84, %s85
    %p99 = scmp.eq.s32.totalorder %s14, 1
    %p100 = por %p98, %p99
    %p102 = scmp.ne.s32.totalorder %s85, %s101
    %p103 = scmp.eq.s32.totalorder %s14, 0
    %p104 = por %p102, %p103
    %p105 = scmp.le.s32.totalorder 1, %s8
    %p106 = scmp.lt.s32.totalorder %s8, 3
    %p107 = pnand %p105, %p106
    %p108 = pneg %p107
    // Predicated region
    $region9: #{downsample_forward.1} parent=5 // pred_check
      _
    $region10: #{downsample_forward.1} parent=5 // pred_check_branch
      %110 = sbr.rel (%p107) target = $region12
    $region11: #{downsample_forward.1} parent=5 // pred_region
      %s111 = ssub.s32 %s8, 1
      // Predicated region
      $region13: #{downsample_forward.1} parent=11 // pred_check
        %p112 = pneg %p69
      $region14: #{downsample_forward.1} parent=11 // pred_check_branch
        %114 = sbr.rel (%p112) target = $region16
      $region15: #{downsample_forward.1} parent=11 // pred_region
        _
      $region16: #{downsample_forward.1} parent=11 // pred_fallthru
        _
    $region12: #{downsample_forward.1} parent=5 // pred_fallthru
      _
    %p115 = scmp.lt.s32.totalorder %s8, 2
    // Predicated region
    $region17: #{downsample_forward.1} parent=5 // pred_check
      %p116 = pneg %p115
    $region18: #{downsample_forward.1} parent=5 // pred_check_branch
      %118 = sbr.rel (%p116) target = $region20
    $region19: #{downsample_forward.1} parent=5 // pred_region
      // Predicated region
      $region21: #{downsample_forward.1} parent=19 // pred_check
        %p119 = pneg %p42
      $region22: #{downsample_forward.1} parent=19 // pred_check_branch
        %121 = sbr.rel (%p119) target = $region24
      $region23: #{downsample_forward.1} parent=19 // pred_region
        %p122 = scmp.lt.s32.totalorder %s15, 1
        %s123 = scalar_select %p122, %s15, 1
        %p124 = scmp.lt.s32.totalorder %s16, 0
        %s125 = scalar_select %p124, %s16, 0
        %s126 = smul.addr %s125, 4
        %s127 = smul.addr %s123, 4
        %s128 = sadd.s32 %s126, %s127
        %s129 = smul.addr %s128, 4
        %s130 = scalar_lea.vmem %s0, %s129
      $region24: #{downsample_forward.1} parent=19 // pred_fallthru
        _
    $region20: #{downsample_forward.1} parent=5 // pred_fallthru
      _
    %p131 = scmp.le.s32.totalorder 1, %s8
    %p132 = scmp.lt.s32.totalorder %s8, 3
    %p133 = pnand %p131, %p132
    %p134 = pneg %p133
    // Predicated region
    $region25: #{downsample_forward.1} parent=5 // pred_check
      _
    $region26: #{downsample_forward.1} parent=5 // pred_check_branch
      %136 = sbr.rel (%p133) target = $region28
    $region27: #{downsample_forward.1} parent=5 // pred_region
      %s137 = ssub.s32 %s8, 1
      %p138 = scmp.lt.s32.totalorder %s17, 1
      %s139 = scalar_select %p138, %s17, 1
      %p140 = scmp.lt.s32.totalorder %s18, 0
      %s141 = scalar_select %p140, %s18, 0
      %s142 = smul.addr %s141, 4
      %s143 = smul.addr %s139, 4
      %s144 = sadd.s32 %s142, %s143
      %s145 = smul.addr %s144, 4
      %s146 = scalar_lea.vmem %s0, %s145
      %p147 = pneg %p48
      %p148 = pneg %p45
      %p149 = pneg %p69
      %p150 = pneg %p66
      %p151 = pneg %p97
      %p152 = pneg %p94
      %p153 = scmp.lt.s32.totalorder %s17, 1
      %s154 = scalar_select %p153, %s17, 1
      %p155 = scmp.lt.s32.totalorder %s18, 0
      %s156 = scalar_select %p155, %s18, 0
      %s157 = smul.addr %s154, 2
      %s158 = sadd.s32 %s156, %s157
      %s159 = smul.addr %s158, 8
      %s160 = scalar_lea.vmem %s2, %s159
      %p161 = scmp.lt.s32.totalorder %s17, 1
      %s162 = scalar_select %p161, %s17, 1
      %p163 = scmp.lt.s32.totalorder %s18, 0
      %s164 = scalar_select %p163, %s18, 0
      %s165 = smul.addr %s164, 4
      %s166 = smul.addr %s162, 4
      %s167 = sadd.s32 %s165, %s166
      %s168 = smul.addr %s167, 4
      %s169 = scalar_lea.vmem %s0, %s168
      %p170 = scmp.lt.s32.totalorder %s17, 1
      %s171 = scalar_select %p170, %s17, 1
      %p172 = scmp.lt.s32.totalorder %s18, 0
      %s173 = scalar_select %p172, %s18, 0
      %s174 = smul.addr %s171, 2
      %s175 = sadd.s32 %s173, %s174
      %s176 = smul.addr %s175, 8
      %s177 = scalar_lea.vmem %s2, %s176
      %v179 = vld [vmem:[%s169] sm:$0xf]
      %v180 = vld [vmem:[%s169 + $0x8] sm:$0xf]
      %181 = vst [vmem:[#allocation2] sm:$0xf] %v179
      %182 = vst [vmem:[#allocation2 + $0x4] sm:$0xf] %v180
      %v183 = vld [vmem:[%s169] sm:$0xff]
      %v184 = vld [vmem:[%s169 + $0x8] sm:$0xff]
      %187 = vrot.lane.b32.xlu0 %v183, 127
      %v188 = vpop.permute.xlu0 %187
      %189 = vrot.lane.b32.xlu0 %v184, 127
      %v190 = vpop.permute.xlu0 %189
      %v191 = vrot.slane %v188, 4
      %v192 = vrot.slane %v190, 4
      %vm193 = vcmask 1039360
      %v194 = vsel %vm193, %v188, %v191
      %v195 = vsel %vm193, %v190, %v192
      %198 = vst [vmem:[#allocation2 + $0x8] sm:$0xf] %v194
      %199 = vst [vmem:[#allocation2 + $0xc] sm:$0xf] %v195
      %v200 = vld [vmem:[%s169] sm:$0xff]
      %v201 = vld [vmem:[%s169 + $0x8] sm:$0xff]
      %204 = vrot.lane.b32.xlu0 %v200, 119
      %v205 = vpop.permute.xlu0 %204
      %206 = vrot.lane.b32.xlu0 %v201, 119
      %v207 = vpop.permute.xlu0 %206
      %v208 = vrot.slane %v205, 4
      %v209 = vrot.slane %v207, 4
      %vm210 = vcmask 973824
      %v211 = vsel %vm210, %v205, %v208
      %v212 = vsel %vm210, %v207, %v209
      %215 = vst [vmem:[#allocation2 + $0x10] sm:$0xf] %v211
      %216 = vst [vmem:[#allocation2 + $0x14] sm:$0xf] %v212
      %v217 = vld [vmem:[%s169] sm:$0xff]
      %v218 = vld [vmem:[%s169 + $0x8] sm:$0xff]
      %221 = vrot.lane.b32.xlu0 %v217, 118
      %v222 = vpop.permute.xlu0 %221
      %223 = vrot.lane.b32.xlu0 %v218, 118
      %v224 = vpop.permute.xlu0 %223
      %v225 = vrot.slane %v222, 4
      %v226 = vrot.slane %v224, 4
      %vm227 = vcmask 965632
      %v228 = vsel %vm227, %v222, %v225
      %v229 = vsel %vm227, %v224, %v226
      %232 = vst [vmem:[#allocation2 + $0x18] sm:$0xf] %v228
      %233 = vst [vmem:[#allocation2 + $0x1c] sm:$0xf] %v229
      %v234 = vld [vmem:[%s1] sm:$0xf]
      %v235 = vld [vmem:[%s1 + $0x4] sm:$0xf]
      %v236 = vld [vmem:[#allocation2] sm:$0xf]
      %v237 = vld [vmem:[#allocation2 + $0x4] sm:$0xf]
      %v238 = vld [vmem:[#allocation2 + $0x8] sm:$0xf]
      %v239 = vld [vmem:[#allocation2 + $0xc] sm:$0xf]
      %v240 = vld [vmem:[#allocation2 + $0x10] sm:$0xf]
      %v241 = vld [vmem:[#allocation2 + $0x14] sm:$0xf]
      %v242 = vld [vmem:[#allocation2 + $0x18] sm:$0xf]
      %v243 = vld [vmem:[#allocation2 + $0x1c] sm:$0xf]
      %v246 = vunpack.c.l.b16 %v234
      %v247 = vunpack.c.l.b16 %v235
      %v248 = vpack.c.b16 %v247, %v246
      %v257 = vunpack.c.l.b16 %v236
      %v258 = vunpack.c.l.b16 %v237
      %v259 = vunpack.c.l.b16 %v238
      %v260 = vunpack.c.l.b16 %v239
      %v261 = vunpack.c.l.b16 %v240
      %v262 = vunpack.c.l.b16 %v241
      %v263 = vunpack.c.l.b16 %v242
      %v264 = vunpack.c.l.b16 %v243
      %v265 = vpack.c.b16 %v258, %v257
      %v266 = vpack.c.b16 %v260, %v259
      %v267 = vpack.c.b16 %v262, %v261
      %v268 = vpack.c.b16 %v264, %v263
      %vm273 = vcmask 523264
      %v275 = vsel %vm273, %v248, 0
      %277 = vmatprep.subr.bf16.mxu0 0
      %278 = vmatpush1.bf16.msra.mxu0 0
      %279 = vmatprep.subr.bf16.mxu0 0
      %280 = vmatpush1.bf16.msra.mxu0 0
      %281 = vmatprep.subr.bf16.mxu0 0
      %282 = vmatpush1.bf16.msra.mxu0 0
      %283 = vmatprep.subr.bf16.mxu0 0
      %284 = vmatpush1.bf16.msra.mxu0 0
      %285 = vmatprep.subr.bf16.mxu0 0
      %286 = vmatpush1.bf16.msra.mxu0 %v268
      %287 = vmatprep.subr.bf16.mxu0 0
      %288 = vmatpush1.bf16.msra.mxu0 %v267
      %289 = vmatprep.subr.bf16.mxu0 0
      %290 = vmatpush1.bf16.msra.mxu0 %v266
      %291 = vmatprep.subr.bf16.mxu0 0
      %292 = vmatpush1.bf16.msra.mxu0 %v265
      %293 = vmatprep.subr.bf16.mxu0 0
      %294 = vmatpush2.bf16.msra.mxu0 0
      %295 = vmatprep.subr.bf16.mxu0 0
      %296 = vmatpush2.bf16.msra.mxu0 0
      %297 = vmatprep.subr.bf16.mxu0 0
      %298 = vmatpush2.bf16.msra.mxu0 0
      %299 = vmatprep.subr.bf16.mxu0 0
      %300 = vmatpush2.bf16.msra.mxu0 0
      %301 = vmatprep.subr.bf16.mxu0 0
      %302 = vmatpush2.bf16.msra.mxu0 0
      %303 = vmatprep.subr.bf16.mxu0 0
      %304 = vmatpush2.bf16.msra.mxu0 0
      %305 = vmatprep.subr.bf16.mxu0 0
      %306 = vmatpush2.bf16.msra.mxu0 0
      %307 = vmatprep.subr.bf16.mxu0 0
      %308 = vmatpush2.bf16.msra.mxu0 0
      %309 = vmatprep.mubr.bf16.mxu0 0
      %310 = vmatmul.mubr.bf16.gmra.mxu0 %v275
      %v311 = vpop.f32.mrf.mxu0
      %v312 = vadd.f32 0.0, %v311
      %v313 = vpop.f32.mrf.mxu0
      %v314 = vpop.f32.mrf.mxu0
      %v315 = vadd.f32 0.0, %v314
      %v316 = vpop.f32.mrf.mxu0
      %317 = vdwg.mxu0
      %v318 = vmul.f32 %v312, 0.2
      %v319 = vmul.f32 %v315, 0.2
      %v320 = vmax.f32 %v312, %v318
      %v321 = vmax.f32 %v315, %v319
      %322 = vst [vmem:[%s177] sm:$0xff] %v320
      %323 = vst [vmem:[%s177 + $0x8] sm:$0xff] %v321
      %p324 = scmp.lt.s32.totalorder %s17, 1
      %s325 = scalar_select %p324, %s17, 1
      %p326 = scmp.lt.s32.totalorder %s18, 0
      %s327 = scalar_select %p326, %s18, 0
      %s328 = smul.addr %s325, 2
      %s329 = sadd.s32 %s327, %s328
      %s330 = smul.addr %s329, 8
      %s331 = scalar_lea.vmem %s2, %s330
      // Predicated region
      $region29: #{downsample_forward.1} parent=27 // pred_check
        %p332 = pneg %p94
      $region30: #{downsample_forward.1} parent=27 // pred_check_branch
        %334 = sbr.rel (%p332) target = $region32
      $region31: #{downsample_forward.1} parent=27 // pred_region
        _
      $region32: #{downsample_forward.1} parent=27 // pred_fallthru
        _
    $region28: #{downsample_forward.1} parent=5 // pred_fallthru
      _
    %p335 = scmp.le.s32.totalorder 2, %s8
    // Predicated region
    $region33: #{downsample_forward.1} parent=5 // pred_check
      %p336 = pneg %p335
    $region34: #{downsample_forward.1} parent=5 // pred_check_branch
      %338 = sbr.rel (%p336) target = $region36
    $region35: #{downsample_forward.1} parent=5 // pred_region
      %s339 = ssub.s32 %s8, 2
      // Predicated region
      $region37: #{downsample_forward.1} parent=35 // pred_check
        %p340 = pneg %p100
      $region38: #{downsample_forward.1} parent=35 // pred_check_branch
        %342 = sbr.rel (%p340) target = $region40
      $region39: #{downsample_forward.1} parent=35 // pred_region
        %p343 = scmp.lt.s32.totalorder %s19, 1
        %s344 = scalar_select %p343, %s19, 1
        %p345 = scmp.lt.s32.totalorder %s20, 0
        %s346 = scalar_select %p345, %s20, 0
        %s347 = smul.addr %s344, 2
        %s348 = sadd.s32 %s346, %s347
        %s349 = smul.addr %s348, 8
        %s350 = scalar_lea.vmem %s2, %s349
      $region40: #{downsample_forward.1} parent=35 // pred_fallthru
        _
    $region36: #{downsample_forward.1} parent=5 // pred_fallthru
      _
  $region6: #{downsample_forward.1} parent=0 // loop_footer
    %s12 = sadd.s32 1, %s8
  $region7: #{downsample_forward.1} parent=0 // loop_footer_branch
    %7 = sbr.rel target = $region3
  $region8: #{downsample_forward.1} parent=0 // loop_exit
    _

</llo_original>
